<compile_context>
chip_gen: v6e
topology: v6e:2x2x1
jax: 0.10.0
libtpu: 0.0.40
codegen_flags: <defaults>
</compile_context>

<pallas_src>
import jax
import jax.numpy as jnp
from jax.experimental import pallas as pl
from jax.experimental.pallas import tpu as pltpu


def _round_up(x, m):
    return (x + m - 1) // m * m


def _patch_embed_kernel(a_ref, w_ref, b_ref, o_ref):
    # a_ref: [tm, K] bf16   w_ref: [K, E] bf16   b_ref: [1, E] f32   o_ref: [tm, E]
    acc = jnp.dot(a_ref[...], w_ref[...], preferred_element_type=jnp.float32)
    # Minimal epilogue: bias add (f32) + cast + single store.
    o_ref[...] = (acc + b_ref[...]).astype(o_ref.dtype)


def patch_embed(x, weight, bias, patch_size, *, tile_m=512):
    """x: [B, C, H, W] float32 (NCHW, same as PyTorch).
    weight: [E, C, p, p] (PyTorch Conv2d layout), bias: [E].
    Returns [B, (H/p)*(W/p), E] in x.dtype."""
    B, C, H, W = x.shape
    E = weight.shape[0]
    p = patch_size
    assert H % p == 0 and W % p == 0
    Hp, Wp = H // p, W // p
    Np = Hp * Wp
    K = C * p * p
    M = B * Np

    compute_dtype = jnp.bfloat16

    # --- glue: extract non-overlapping patches, flatten in (C, ph, pw) order
    # (matches PyTorch conv-weight flattening). Cast to bf16 in the same pass
    # so the materialized patch matrix is half the bytes.
    a = x.astype(compute_dtype).reshape(B, C, Hp, p, Wp, p)
    a = a.transpose(0, 2, 4, 1, 3, 5).reshape(M, K)

    # Conv weight [E, C, p, p] -> matmul weight [K, E] (bf16); bias stays f32.
    wt = weight.reshape(E, K).T.astype(compute_dtype)
    b2 = bias.reshape(1, E).astype(jnp.float32)

    # Row tile: as large as practical (512) to amortize per-step overhead and
    # keep DMAs long; pad M so the grid divides evenly (robust for Np like 196).
    tm = min(tile_m, _round_up(M, 128))
    M_pad = _round_up(M, tm)
    if M_pad != M:
        a = jnp.pad(a, ((0, M_pad - M), (0, 0)))
    grid_m = M_pad // tm  # on v7x, >=2 and even splits cleanly across both TCs

    # VMEM footprint: double-buffered A and O blocks; W/bias have constant
    # index_maps (fetched once) but budget 2x to be conservative.
    out_itemsize = jnp.dtype(x.dtype).itemsize
    vmem_bytes = (
        2 * tm * K * jnp.dtype(compute_dtype).itemsize      # A blocks
        + 2 * K * E * jnp.dtype(compute_dtype).itemsize     # W (resident)
        + 2 * tm * E * out_itemsize                         # O blocks
        + 2 * E * 4                                         # bias
    )
    # Stay within every generation's scoped default / physical VMEM
    # (v5e scoped default 16 MiB, v6e/v7x 32 MiB scoped, v7x 64 MiB physical).
    vmem_limit = int(min(max(2 * vmem_bytes, 32 * 1024 * 1024), 64 * 1024 * 1024))

    out = pl.pallas_call(
        _patch_embed_kernel,
        out_shape=jax.ShapeDtypeStruct((M_pad, E), x.dtype),
        grid_spec=pltpu.PrefetchScalarGridSpec(
            num_scalar_prefetch=0,
            grid=(grid_m,),
            in_specs=[
                pl.BlockSpec((tm, K), lambda i: (i, 0)),
                pl.BlockSpec((K, E), lambda i: (0, 0)),   # constant -> no refetch
                pl.BlockSpec((1, E), lambda i: (0, 0)),   # constant -> no refetch
            ],
            out_specs=pl.BlockSpec((tm, E), lambda i: (i, 0)),
        ),
        compiler_params=pltpu.CompilerParams(
            dimension_semantics=("parallel",),
            vmem_limit_bytes=vmem_limit,
        ),
    )(a, wt, b2)

    if M_pad != M:
        out = out[:M]
    return out.reshape(B, Np, E)


def _reference(x, weight, bias, patch_size):
    """Pure-JAX f32 reference using lax conv (mirrors the PyTorch forward)."""
    y = jax.lax.conv_general_dilated(
        x, weight,
        window_strides=(patch_size, patch_size),
        padding="VALID",
        dimension_numbers=("NCHW", "OIHW", "NCHW"),
    ) + bias.reshape(1, -1, 1, 1)
    B, E, Hp, Wp = y.shape
    return y.reshape(B, E, Hp * Wp).transpose(0, 2, 1)


if __name__ == "__main__":
    # Small shapes consistent with the module's forward.
    B, C, H, W = 2, 4, 16, 16
    patch_size = 2
    embed_dim = 128

    key = jax.random.PRNGKey(0)
    kx, kw, kb = jax.random.split(key, 3)
    x = jax.random.normal(kx, (B, C, H, W), dtype=jnp.float32)
    # Deterministic Conv2d-style params: weight [E, C, p, p], bias [E].
    fan_in = C * patch_size * patch_size
    weight = jax.random.normal(
        kw, (embed_dim, C, patch_size, patch_size), dtype=jnp.float32
    ) * (1.0 / jnp.sqrt(fan_in))
    bias = jax.random.normal(kb, (embed_dim,), dtype=jnp.float32) * 0.01

    out = patch_embed(x, weight, bias, patch_size)
    out = jax.block_until_ready(out)

    ref = _reference(x, weight, bias, patch_size)
    assert out.shape == (B, (H // patch_size) * (W // patch_size), embed_dim)
    # bf16 MXU inputs with f32 accumulation -> loosened tolerance vs f32 conv.
    err = float(jnp.max(jnp.abs(out - ref)))
    assert jnp.allclose(out, ref, atol=5e-2, rtol=5e-2), f"max abs err {err}"

    print("KERNEL_OK")
</pallas_src>

<mosaic_0001>
module attributes {stable_mosaic.version = 11 : i64} {
  func.func @_patch_embed_kernel(%arg0: i32, %arg1: memref<128x16xbf16, #tpu.memory_space<vmem>>, %arg2: memref<16x128xbf16, #tpu.memory_space<vmem>>, %arg3: memref<1x128xf32, #tpu.memory_space<vmem>>, %arg4: memref<128x128xf32, #tpu.memory_space<vmem>>) attributes {dimension_semantics = [#tpu.dimension_semantics<parallel>], iteration_bounds = array<i64: 1>, scalar_prefetch = 0 : i64, scratch_operands = 0 : i64, tpu.core_type = #tpu.core_type<tc>, window_params = [{transform_indices = @transform_0, window_bounds = array<i64: 128, 16>}, {pipeline_mode = #tpu.pipeline_mode<synchronous>, transform_indices = @transform_1, window_bounds = array<i64: 16, 128>}, {pipeline_mode = #tpu.pipeline_mode<synchronous>, transform_indices = @transform_2, window_bounds = array<i64: 1, 128>}, {transform_indices = @transform_3, window_bounds = array<i64: 128, 128>}]} {
    %c0 = arith.constant 0 : index
    %c0_0 = arith.constant 0 : index
    %0 = vector.load %arg1[%c0, %c0_0] : memref<128x16xbf16, #tpu.memory_space<vmem>>, vector<128x16xbf16>
    %c0_1 = arith.constant 0 : index
    %c0_2 = arith.constant 0 : index
    %1 = vector.load %arg2[%c0_1, %c0_2] : memref<16x128xbf16, #tpu.memory_space<vmem>>, vector<16x128xbf16>
    %cst = arith.constant dense<0.000000e+00> : vector<128x128xf32>
    %2 = tpu.matmul %0, %1, %cst {dimension_numbers = #tpu.dot_dimension_numbers<[1], [0], [0], [1], [0, 0, 1, 1], [], []>} : vector<128x16xbf16>, vector<16x128xbf16>, vector<128x128xf32> -> vector<128x128xf32>
    %c0_3 = arith.constant 0 : index
    %c0_4 = arith.constant 0 : index
    %3 = vector.load %arg3[%c0_3, %c0_4] : memref<1x128xf32, #tpu.memory_space<vmem>>, vector<1x128xf32>
    %4 = vector.broadcast %3 : vector<1x128xf32> to vector<128x128xf32>
    %5 = arith.addf %2, %4 : vector<128x128xf32>
    %c0_5 = arith.constant 0 : index
    %c0_6 = arith.constant 0 : index
    %6 = vector.load %arg4[%c0_5, %c0_6] : memref<128x128xf32, #tpu.memory_space<vmem>>, vector<128x128xf32>
    tpu.vector_store %arg4[%c0_5, %c0_6], %5 {strides = array<i32>} : memref<128x128xf32, #tpu.memory_space<vmem>>, vector<128x128xf32>,
    return
  }
  func.func @transform_0(%arg0: i32) -> (i32, i32) {
    %c0_i32 = arith.constant 0 : i32
    %c0_i32_0 = arith.constant 0 : i32
    return %arg0, %c0_i32 : i32, i32
  }
  func.func @transform_1(%arg0: i32) -> (i32, i32) {
    %c0_i32 = arith.constant 0 : i32
    %c0_i32_0 = arith.constant 0 : i32
    %c0_i32_1 = arith.constant 0 : i32
    return %c0_i32, %c0_i32_0 : i32, i32
  }
  func.func @transform_2(%arg0: i32) -> (i32, i32) {
    %c0_i32 = arith.constant 0 : i32
    %c0_i32_0 = arith.constant 0 : i32
    %c0_i32_1 = arith.constant 0 : i32
    return %c0_i32, %c0_i32_0 : i32, i32
  }
  func.func @transform_3(%arg0: i32) -> (i32, i32) {
    %c0_i32 = arith.constant 0 : i32
    %c0_i32_0 = arith.constant 0 : i32
    return %arg0, %c0_i32 : i32, i32
  }
}

</mosaic_0001>

<llo_original>
// kernel: tpu_custom_call.1
$region0: #{tpu_custom_call.1}
  #allocation0 [shape = 'u32[]', space=smem, size = 0x4, offset = 0x4, fixed_abs, tag = 'smem constant byte address 0x4 - core index']
  #allocation1 [shape = 'u32[144,128]{1,0:T(1,128)}', space=vmem, size = 0x12000, scoped, tag = 'internal scratch']
  %s0 = inlined_call_operand.vmem [shape: bf16[128,16], index: 0, kind: input, shape index: {}]
  %s1 = inlined_call_operand.vmem [shape: bf16[16,128], index: 1, kind: input, shape index: {}]
  %s2 = inlined_call_operand.vmem [shape: f32[1,128], index: 2, kind: input, shape index: {}]
  %s3 = inlined_call_operand.hbm [shape: f32[128,128], index: 3, kind: output, shape index: {}]
  %s4 = sld [smem:[#allocation0]]
  $region22: #{tpu_custom_call.1} parent=0
    _
  %s6 = ssub.s32 1, %s4
  %s7 = scalar_select 0, %s6, %s4
  $region1: #{tpu_custom_call.1} parent=0
    #allocation2 [shape = 'u8[65536]{0}', space=vmem, size = 0x10000, scoped, tag = 'output window, operand 0, single buffered']
    #allocation3 [shape = 's32[1]{0}', space=sflag, size = 0x4, scoped, tag = 'scoped memory for tpu_custom_call.1']
    %8 = vsyncpa [#allocation3], 0
    // Predicated region
    $region2: #{tpu_custom_call.1} parent=1 // pred_check
      _
    $region3: #{tpu_custom_call.1} parent=1 // pred_check_branch
      %10 = sbr.rel (0) target = $region5
    $region4: #{tpu_custom_call.1} parent=1 // pred_region
      _
    $region5: #{tpu_custom_call.1} parent=1 // pred_fallthru
      _
    // Predicated region
    $region6: #{tpu_custom_call.1} parent=1 // pred_check
      _
    $region7: #{tpu_custom_call.1} parent=1 // pred_check_branch
      %12 = sbr.rel (0) target = $region9
    $region8: #{tpu_custom_call.1} parent=1 // pred_region
      _
    $region9: #{tpu_custom_call.1} parent=1 // pred_fallthru
      _
    // Predicated region
    $region10: #{tpu_custom_call.1} parent=1 // pred_check
      _
    $region11: #{tpu_custom_call.1} parent=1 // pred_check_branch
      %14 = sbr.rel (0) target = $region13
    $region12: #{tpu_custom_call.1} parent=1 // pred_region
      _
    $region13: #{tpu_custom_call.1} parent=1 // pred_fallthru
      _
    %v16 = vld [vmem:[%s0] sm:$0xf]
    %v17 = vld [vmem:[%s0 + $0x4] sm:$0xf]
    %v18 = vld [vmem:[%s0 + $0x8] sm:$0xf]
    %v19 = vld [vmem:[%s0 + $0xc] sm:$0xf]
    %v20 = vld [vmem:[%s0 + $0x10] sm:$0xf]
    %v21 = vld [vmem:[%s0 + $0x14] sm:$0xf]
    %v22 = vld [vmem:[%s0 + $0x18] sm:$0xf]
    %v23 = vld [vmem:[%s0 + $0x1c] sm:$0xf]
    %v24 = vld [vmem:[%s0 + $0x20] sm:$0xf]
    %v25 = vld [vmem:[%s0 + $0x24] sm:$0xf]
    %v26 = vld [vmem:[%s0 + $0x28] sm:$0xf]
    %v27 = vld [vmem:[%s0 + $0x2c] sm:$0xf]
    %v28 = vld [vmem:[%s0 + $0x30] sm:$0xf]
    %v29 = vld [vmem:[%s0 + $0x34] sm:$0xf]
    %v30 = vld [vmem:[%s0 + $0x38] sm:$0xf]
    %v31 = vld [vmem:[%s0 + $0x3c] sm:$0xf]
    %v32 = vld [vmem:[%s1] sm:$0xf]
    %v33 = vld [vmem:[%s1 + $0x4] sm:$0xf]
    %v34 = vld [vmem:[%s2] sm:$0x1]
    %v36 = vlaneseq
    %v37 = vshrl.u32 %v36, 7
    %v38 = vsub.s32 0, %v37
    %v39 = vrot.slane %v34, %v38
    %v57 = vunpack.c.l.b16 %v16
    %v58 = vunpack.c.l.b16 %v17
    %v59 = vunpack.c.l.b16 %v18
    %v60 = vunpack.c.l.b16 %v19
    %v61 = vunpack.c.l.b16 %v20
    %v62 = vunpack.c.l.b16 %v21
    %v63 = vunpack.c.l.b16 %v22
    %v64 = vunpack.c.l.b16 %v23
    %v65 = vunpack.c.l.b16 %v24
    %v66 = vunpack.c.l.b16 %v25
    %v67 = vunpack.c.l.b16 %v26
    %v68 = vunpack.c.l.b16 %v27
    %v69 = vunpack.c.l.b16 %v28
    %v70 = vunpack.c.l.b16 %v29
    %v71 = vunpack.c.l.b16 %v30
    %v72 = vunpack.c.l.b16 %v31
    %v73 = vpack.c.b16 %v58, %v57
    %v74 = vpack.c.b16 %v60, %v59
    %v75 = vpack.c.b16 %v62, %v61
    %v76 = vpack.c.b16 %v64, %v63
    %v77 = vpack.c.b16 %v66, %v65
    %v78 = vpack.c.b16 %v68, %v67
    %v79 = vpack.c.b16 %v70, %v69
    %v80 = vpack.c.b16 %v72, %v71
    %v83 = vunpack.c.l.b16 %v32
    %v84 = vunpack.c.l.b16 %v33
    %v85 = vpack.c.b16 %v84, %v83
    %vm87 = vcmask 130048
    %v89 = vsel %vm87, %v73, 0
    %v92 = vsel %vm87, %v74, 0
    %v95 = vsel %vm87, %v75, 0
    %v98 = vsel %vm87, %v76, 0
    %v101 = vsel %vm87, %v77, 0
    %v104 = vsel %vm87, %v78, 0
    %v107 = vsel %vm87, %v79, 0
    %v110 = vsel %vm87, %v80, 0
    %112 = vmatprep.subr.bf16.mxu0 0
    %113 = vmatpush1.bf16.msra.mxu0 0
    %114 = vmatprep.subr.bf16.mxu0 0
    %115 = vmatpush1.bf16.msra.mxu0 0
    %116 = vmatprep.subr.bf16.mxu0 0
    %117 = vmatpush1.bf16.msra.mxu0 0
    %118 = vmatprep.subr.bf16.mxu0 0
    %119 = vmatpush1.bf16.msra.mxu0 0
    %120 = vmatprep.subr.bf16.mxu0 0
    %121 = vmatpush1.bf16.msra.mxu0 0
    %122 = vmatprep.subr.bf16.mxu0 0
    %123 = vmatpush1.bf16.msra.mxu0 0
    %124 = vmatprep.subr.bf16.mxu0 0
    %125 = vmatpush1.bf16.msra.mxu0 0
    %126 = vmatprep.subr.bf16.mxu0 0
    %127 = vmatpush1.bf16.msra.mxu0 %v85
    %128 = vmatprep.subr.bf16.mxu0 0
    %129 = vmatpush2.bf16.msra.mxu0 0
    %130 = vmatprep.subr.bf16.mxu0 0
    %131 = vmatpush2.bf16.msra.mxu0 0
    %132 = vmatprep.subr.bf16.mxu0 0
    %133 = vmatpush2.bf16.msra.mxu0 0
    %134 = vmatprep.subr.bf16.mxu0 0
    %135 = vmatpush2.bf16.msra.mxu0 0
    %136 = vmatprep.subr.bf16.mxu0 0
    %137 = vmatpush2.bf16.msra.mxu0 0
    %138 = vmatprep.subr.bf16.mxu0 0
    %139 = vmatpush2.bf16.msra.mxu0 0
    %140 = vmatprep.subr.bf16.mxu0 0
    %141 = vmatpush2.bf16.msra.mxu0 0
    %142 = vmatprep.subr.bf16.mxu0 0
    %143 = vmatpush2.bf16.msra.mxu0 0
    %144 = vmatprep.mubr.bf16.mxu0 0
    %145 = vmatmul.mubr.bf16.gmra.mxu0 %v89
    %v146 = vpop.f32.mrf.mxu0
    %v147 = vadd.f32 %v39, %v146
    %v148 = vpop.f32.mrf.mxu0
    %v149 = vpop.f32.mrf.mxu0
    %v150 = vadd.f32 %v39, %v149
    %v151 = vpop.f32.mrf.mxu0
    %152 = vmatprep.mubr.bf16.mxu0 0
    %153 = vmatmul.mubr.bf16.gmra.mxu0 %v92
    %v154 = vpop.f32.mrf.mxu0
    %v155 = vadd.f32 %v39, %v154
    %v156 = vpop.f32.mrf.mxu0
    %v157 = vpop.f32.mrf.mxu0
    %v158 = vadd.f32 %v39, %v157
    %v159 = vpop.f32.mrf.mxu0
    %160 = vmatprep.mubr.bf16.mxu0 0
    %161 = vmatmul.mubr.bf16.gmra.mxu0 %v95
    %v162 = vpop.f32.mrf.mxu0
    %v163 = vadd.f32 %v39, %v162
    %v164 = vpop.f32.mrf.mxu0
    %v165 = vpop.f32.mrf.mxu0
    %v166 = vadd.f32 %v39, %v165
    %v167 = vpop.f32.mrf.mxu0
    %168 = vmatprep.mubr.bf16.mxu0 0
    %169 = vmatmul.mubr.bf16.gmra.mxu0 %v98
    %v170 = vpop.f32.mrf.mxu0
    %v171 = vadd.f32 %v39, %v170
    %v172 = vpop.f32.mrf.mxu0
    %v173 = vpop.f32.mrf.mxu0
    %v174 = vadd.f32 %v39, %v173
    %v175 = vpop.f32.mrf.mxu0
    %176 = vmatprep.mubr.bf16.mxu0 0
    %177 = vmatmul.mubr.bf16.gmra.mxu0 %v101
    %v178 = vpop.f32.mrf.mxu0
    %v179 = vadd.f32 %v39, %v178
    %v180 = vpop.f32.mrf.mxu0
    %v181 = vpop.f32.mrf.mxu0
    %v182 = vadd.f32 %v39, %v181
    %v183 = vpop.f32.mrf.mxu0
    %184 = vmatprep.mubr.bf16.mxu0 0
    %185 = vmatmul.mubr.bf16.gmra.mxu0 %v104
    %v186 = vpop.f32.mrf.mxu0
    %v187 = vadd.f32 %v39, %v186
    %v188 = vpop.f32.mrf.mxu0
    %v189 = vpop.f32.mrf.mxu0
    %v190 = vadd.f32 %v39, %v189
    %v191 = vpop.f32.mrf.mxu0
    %192 = vmatprep.mubr.bf16.mxu0 0
    %193 = vmatmul.mubr.bf16.gmra.mxu0 %v107
    %v194 = vpop.f32.mrf.mxu0
    %v195 = vadd.f32 %v39, %v194
    %v196 = vpop.f32.mrf.mxu0
    %v197 = vpop.f32.mrf.mxu0
    %v198 = vadd.f32 %v39, %v197
    %v199 = vpop.f32.mrf.mxu0
    %200 = vmatprep.mubr.bf16.mxu0 0
    %201 = vmatmul.mubr.bf16.gmra.mxu0 %v110
    %v202 = vpop.f32.mrf.mxu0
    %v203 = vadd.f32 %v39, %v202
    %v204 = vpop.f32.mrf.mxu0
    %v205 = vpop.f32.mrf.mxu0
    %v206 = vadd.f32 %v39, %v205
    %v207 = vpop.f32.mrf.mxu0
    %208 = vdwg.mxu0
    %209 = vst [vmem:[#allocation2] sm:$0xff] %v147
    %210 = vst [vmem:[#allocation2 + $0x8] sm:$0xff] %v150
    %211 = vst [vmem:[#allocation2 + $0x10] sm:$0xff] %v155
    %212 = vst [vmem:[#allocation2 + $0x18] sm:$0xff] %v158
    %213 = vst [vmem:[#allocation2 + $0x20] sm:$0xff] %v163
    %214 = vst [vmem:[#allocation2 + $0x28] sm:$0xff] %v166
    %215 = vst [vmem:[#allocation2 + $0x30] sm:$0xff] %v171
    %216 = vst [vmem:[#allocation2 + $0x38] sm:$0xff] %v174
    %217 = vst [vmem:[#allocation2 + $0x40] sm:$0xff] %v179
    %218 = vst [vmem:[#allocation2 + $0x48] sm:$0xff] %v182
    %219 = vst [vmem:[#allocation2 + $0x50] sm:$0xff] %v187
    %220 = vst [vmem:[#allocation2 + $0x58] sm:$0xff] %v190
    %221 = vst [vmem:[#allocation2 + $0x60] sm:$0xff] %v195
    %222 = vst [vmem:[#allocation2 + $0x68] sm:$0xff] %v198
    %223 = vst [vmem:[#allocation2 + $0x70] sm:$0xff] %v203
    %224 = vst [vmem:[#allocation2 + $0x78] sm:$0xff] %v206
    // Predicated region
    $region14: #{tpu_custom_call.1} parent=1 // pred_check
      _
    $region15: #{tpu_custom_call.1} parent=1 // pred_check_branch
      %226 = sbr.rel (0) target = $region17
    $region16: #{tpu_custom_call.1} parent=1 // pred_region
      %s228 = ssub.s32 2048, 2048
      %229 = vsyncadd [#allocation3], %s228
      %s230 = sshll.u32 [#allocation2], 4
      %s231 = int_to_ptr.vmem [resolvable:$true] %s230
      %236 = dma.vmem_to_hbm [thread:$0]  %s231, 2048, %s3, [#allocation3], 128, 128, 8
    $region17: #{tpu_custom_call.1} parent=1 // pred_fallthru
      _
    // Predicated region
    $region18: #{tpu_custom_call.1} parent=1 // pred_check
      _
    $region19: #{tpu_custom_call.1} parent=1 // pred_check_branch
      %238 = sbr.rel (0) target = $region21
    $region20: #{tpu_custom_call.1} parent=1 // pred_region
      %239 = dma.done [#allocation3], 2048
    $region21: #{tpu_custom_call.1} parent=1 // pred_fallthru
      _
    %240 = vsyncpa [#allocation3], 1

</llo_original>
